<compile_context>
chip_gen: v6e
topology: v6e:2x2x1
jax: 0.10.0
libtpu: 0.0.40
codegen_flags: <defaults>
</compile_context>

<pallas_src>
import math

import jax
import jax.numpy as jnp
from jax.experimental import pallas as pl
from jax.experimental.pallas import tpu as pltpu


def _round_up(x: int, m: int) -> int:
    return ((x + m - 1) // m) * m


def autoenc_kernel(x_ref, w1_ref, b1_ref, w2_ref, out_ref, p_ref):
    # Hot path: two MXU matmuls + numerically-stable softmax (max/sum -> XLU,
    # exp + reciprocal -> EUP, the rest -> VPU).
    x = x_ref[...]
    logits = jnp.dot(x, w1_ref[...], preferred_element_type=jnp.float32)
    logits = logits + b1_ref[...].astype(jnp.float32)

    m = jnp.max(logits, axis=-1, keepdims=True)
    e = jnp.exp(logits - m)
    denom = jnp.sum(e, axis=-1, keepdims=True)
    # Exact reciprocal (approx=False) keeps the 1e-5 tolerance vs. the torch
    # reference; multiply-by-reciprocal avoids a full-width VALU divide.
    inv = pl.reciprocal(denom)
    p = e * inv

    # Only downcast the probabilities when the weight dtype is narrower than
    # f32 (gating avoids needless f32->bf16 truncation on the all-f32 path,
    # which both hurts accuracy and adds VALU cast work on v5e).
    if jnp.dtype(w2_ref.dtype) == jnp.dtype(jnp.float32):
        p_mm = p
    else:
        p_mm = p.astype(w2_ref.dtype)

    out = jnp.dot(p_mm, w2_ref[...], preferred_element_type=jnp.float32)
    out_ref[...] = out.astype(out_ref.dtype)
    p_ref[...] = p.astype(p_ref.dtype)


def autoenc_forward(x, w1, b1, w2, *, block_rows: int = 512):
    """x: (..., emb_dim).  Returns (out, w2, p) matching the PyTorch module.

    block_rows: M-tile size.  512 keeps the double-buffered working set well
    under v7x's 64 MiB VMEM while still hiding HBM latency on v5e/v6e.
    """
    emb_dim = x.shape[-1]
    k_aspect = w1.shape[-1]
    lead = x.shape[:-1]
    M = math.prod(lead) if lead else 1
    x2d = x.reshape(M, emb_dim)

    # M tile: multiple of 8 (sublane), no larger than needed.
    tm = _round_up(min(block_rows, max(M, 8)), 8)
    m_pad = _round_up(M, tm)
    if m_pad != M:
        # Zero-pad rows; padded rows produce garbage-free (finite) outputs that
        # are sliced away below, so the single-pass softmax stays valid.
        x2d = jnp.pad(x2d, ((0, m_pad - M), (0, 0)))
    grid = (m_pad // tm,)

    itemsize = jnp.dtype(x.dtype).itemsize
    w_itemsize = jnp.dtype(w1.dtype).itemsize
    w_bytes = (w1.size + b1.size + w2.size) * w_itemsize
    # Double-buffered x tile + double-buffered out/p tiles + resident weights.
    tile_bytes = 2 * tm * emb_dim * itemsize            # x (2 buffers)
    tile_bytes += 2 * tm * emb_dim * itemsize           # out (2 buffers)
    tile_bytes += 2 * tm * k_aspect * itemsize          # p (2 buffers)
    vmem_limit = int(min(max(2 * (tile_bytes + 2 * w_bytes) + (4 << 20),
                             16 << 20),
                         64 << 20))                     # stay under v7x physical VMEM

    cost = pl.CostEstimate(
        flops=2 * M * emb_dim * k_aspect * 2,           # two matmuls
        transcendentals=M * k_aspect,                   # exp in softmax
        bytes_accessed=int((M * (2 * emb_dim + k_aspect)) * itemsize + w_bytes),
    )

    # TODO(synk): at the example sizes (E=32, K=16) the output last dims are
    # below the 128-lane width, so stores are masked and MXU columns are mostly
    # idle; padding E/K to 128 would change the module's semantics, so it is
    # left to the caller's problem sizing.
    out2d, p2d = pl.pallas_call(
        autoenc_kernel,
        out_shape=(
            jax.ShapeDtypeStruct((m_pad, emb_dim), x.dtype),
            jax.ShapeDtypeStruct((m_pad, k_aspect), x.dtype),
        ),
        grid=grid,
        in_specs=[
            pl.BlockSpec((tm, emb_dim), lambda i: (i, 0)),        # x: tiled over M
            pl.BlockSpec((emb_dim, k_aspect), lambda i: (0, 0)),  # w1: resident
            pl.BlockSpec((1, k_aspect), lambda i: (0, 0)),        # b1: resident
            pl.BlockSpec((k_aspect, emb_dim), lambda i: (0, 0)),  # w2: resident
        ],
        out_specs=(
            pl.BlockSpec((tm, emb_dim), lambda i: (i, 0)),
            pl.BlockSpec((tm, k_aspect), lambda i: (i, 0)),
        ),
        compiler_params=pltpu.CompilerParams(
            dimension_semantics=("parallel",),
            vmem_limit_bytes=vmem_limit,
        ),
        cost_estimate=cost,
    )(x2d, w1, b1, w2)

    if m_pad != M:
        out2d = out2d[:M]
        p2d = p2d[:M]
    out = out2d.reshape(*lead, emb_dim)
    p = p2d.reshape(*lead, k_aspect)
    # t_trans_matrix.weight.permute(1, 0) == (k_aspect, emb_dim) == w2
    return out, w2, p


def init_params(key, emb_dim, k_aspect, dtype=jnp.float32):
    """Deterministic init mimicking torch.nn.Linear defaults (uniform +-1/sqrt(fan_in))."""
    k1, k2, k3 = jax.random.split(key, 3)
    bnd1 = 1.0 / (emb_dim ** 0.5)
    bnd2 = 1.0 / (k_aspect ** 0.5)
    # w_trans_matrix: Linear(emb_dim -> k_aspect), stored transposed as (E, K)
    w1 = jax.random.uniform(k1, (emb_dim, k_aspect), dtype, -bnd1, bnd1)
    b1 = jax.random.uniform(k2, (1, k_aspect), dtype, -bnd1, bnd1)
    # t_trans_matrix: Linear(k_aspect -> emb_dim, bias=False), stored transposed as (K, E)
    w2 = jax.random.uniform(k3, (k_aspect, emb_dim), dtype, -bnd2, bnd2)
    return w1, b1, w2


if __name__ == "__main__":
    key = jax.random.PRNGKey(0)
    kx, kp = jax.random.split(key)

    batch, seq, emb_dim, k_aspect = 2, 8, 32, 16
    x = jax.random.normal(kx, (batch, seq, emb_dim), dtype=jnp.float32)
    w1, b1, w2 = init_params(kp, emb_dim, k_aspect)

    out, t_weight_T, p = autoenc_forward(x, w1, b1, w2)
    jax.block_until_ready((out, t_weight_T, p))

    # Reference check in plain JAX (same math as the PyTorch module).
    logits = x @ w1 + b1[0]
    p_ref = jax.nn.softmax(logits, axis=-1)
    out_ref = p_ref @ w2
    assert out.shape == (batch, seq, emb_dim)
    assert p.shape == (batch, seq, k_aspect)
    assert t_weight_T.shape == (k_aspect, emb_dim)
    assert jnp.allclose(out, out_ref, atol=1e-5, rtol=1e-5)
    assert jnp.allclose(p, p_ref, atol=1e-5, rtol=1e-5)

    print("KERNEL_OK")
</pallas_src>

<mosaic_0001>
module attributes {stable_mosaic.version = 11 : i64} {
  func.func @autoenc_kernel(%arg0: i32, %arg1: memref<16x32xf32, #tpu.memory_space<vmem>>, %arg2: memref<32x16xf32, #tpu.memory_space<vmem>>, %arg3: memref<1x16xf32, #tpu.memory_space<vmem>>, %arg4: memref<16x32xf32, #tpu.memory_space<vmem>>, %arg5: memref<16x32xf32, #tpu.memory_space<vmem>>, %arg6: memref<16x16xf32, #tpu.memory_space<vmem>>) attributes {dimension_semantics = [#tpu.dimension_semantics<parallel>], iteration_bounds = array<i64: 1>, scalar_prefetch = 0 : i64, scratch_operands = 0 : i64, tpu.core_type = #tpu.core_type<tc>, window_params = [{transform_indices = @transform_0, window_bounds = array<i64: 16, 32>}, {pipeline_mode = #tpu.pipeline_mode<synchronous>, transform_indices = @transform_1, window_bounds = array<i64: 32, 16>}, {pipeline_mode = #tpu.pipeline_mode<synchronous>, transform_indices = @transform_2, window_bounds = array<i64: 1, 16>}, {pipeline_mode = #tpu.pipeline_mode<synchronous>, transform_indices = @transform_3, window_bounds = array<i64: 16, 32>}, {transform_indices = @transform_4, window_bounds = array<i64: 16, 32>}, {transform_indices = @transform_5, window_bounds = array<i64: 16, 16>}]} {
    %c0 = arith.constant 0 : index
    %c0_0 = arith.constant 0 : index
    %0 = vector.load %arg1[%c0, %c0_0] : memref<16x32xf32, #tpu.memory_space<vmem>>, vector<16x32xf32>
    %c0_1 = arith.constant 0 : index
    %c0_2 = arith.constant 0 : index
    %1 = vector.load %arg2[%c0_1, %c0_2] : memref<32x16xf32, #tpu.memory_space<vmem>>, vector<32x16xf32>
    %cst = arith.constant dense<0.000000e+00> : vector<16x16xf32>
    %2 = tpu.matmul %0, %1, %cst {dimension_numbers = #tpu.dot_dimension_numbers<[1], [0], [0], [1], [0, 0, 1, 1], [], []>} : vector<16x32xf32>, vector<32x16xf32>, vector<16x16xf32> -> vector<16x16xf32>
    %c0_3 = arith.constant 0 : index
    %c0_4 = arith.constant 0 : index
    %3 = vector.load %arg3[%c0_3, %c0_4] : memref<1x16xf32, #tpu.memory_space<vmem>>, vector<1x16xf32>
    %4 = vector.broadcast %3 : vector<1x16xf32> to vector<16x16xf32>
    %5 = arith.addf %2, %4 : vector<16x16xf32>
    %cst_5 = arith.constant dense<0xFF800000> : vector<16xf32>
    %6 = vector.multi_reduction <maximumf>, %5, %cst_5 [1] : vector<16x16xf32> to vector<16xf32>
    %7 = vector.shape_cast %6 : vector<16xf32> to vector<16x1xf32>
    %8 = vector.broadcast %7 : vector<16x1xf32> to vector<16x16xf32>
    %9 = arith.subf %5, %8 : vector<16x16xf32>
    %10 = math.exp %9 : vector<16x16xf32>
    %cst_6 = arith.constant dense<0.000000e+00> : vector<16xf32>
    %11 = vector.multi_reduction <add>, %10, %cst_6 [1] : vector<16x16xf32> to vector<16xf32>
    %12 = vector.shape_cast %11 : vector<16xf32> to vector<16x1xf32>
    %13 = tpu.reciprocal %12 : vector<16x1xf32> -> vector<16x1xf32>
    %14 = vector.broadcast %13 : vector<16x1xf32> to vector<16x16xf32>
    %15 = arith.mulf %10, %14 : vector<16x16xf32>
    %c0_7 = arith.constant 0 : index
    %c0_8 = arith.constant 0 : index
    %16 = vector.load %arg4[%c0_7, %c0_8] : memref<16x32xf32, #tpu.memory_space<vmem>>, vector<16x32xf32>
    %cst_9 = arith.constant dense<0.000000e+00> : vector<16x32xf32>
    %17 = tpu.matmul %15, %16, %cst_9 {dimension_numbers = #tpu.dot_dimension_numbers<[1], [0], [0], [1], [0, 0, 1, 1], [], []>} : vector<16x16xf32>, vector<16x32xf32>, vector<16x32xf32> -> vector<16x32xf32>
    %c0_10 = arith.constant 0 : index
    %c0_11 = arith.constant 0 : index
    %18 = vector.load %arg5[%c0_10, %c0_11] : memref<16x32xf32, #tpu.memory_space<vmem>>, vector<16x32xf32>
    tpu.vector_store %arg5[%c0_10, %c0_11], %17 {strides = array<i32>} : memref<16x32xf32, #tpu.memory_space<vmem>>, vector<16x32xf32>,
    %c0_12 = arith.constant 0 : index
    %c0_13 = arith.constant 0 : index
    %19 = vector.load %arg6[%c0_12, %c0_13] : memref<16x16xf32, #tpu.memory_space<vmem>>, vector<16x16xf32>
    tpu.vector_store %arg6[%c0_12, %c0_13], %15 {strides = array<i32>} : memref<16x16xf32, #tpu.memory_space<vmem>>, vector<16x16xf32>,
    return
  }
  func.func @transform_0(%arg0: i32) -> (i32, i32) {
    %c0_i32 = arith.constant 0 : i32
    %c0_i32_0 = arith.constant 0 : i32
    return %arg0, %c0_i32 : i32, i32
  }
  func.func @transform_1(%arg0: i32) -> (i32, i32) {
    %c0_i32 = arith.constant 0 : i32
    %c0_i32_0 = arith.constant 0 : i32
    %c0_i32_1 = arith.constant 0 : i32
    return %c0_i32, %c0_i32_0 : i32, i32
  }
  func.func @transform_2(%arg0: i32) -> (i32, i32) {
    %c0_i32 = arith.constant 0 : i32
    %c0_i32_0 = arith.constant 0 : i32
    %c0_i32_1 = arith.constant 0 : i32
    return %c0_i32, %c0_i32_0 : i32, i32
  }
  func.func @transform_3(%arg0: i32) -> (i32, i32) {
    %c0_i32 = arith.constant 0 : i32
    %c0_i32_0 = arith.constant 0 : i32
    %c0_i32_1 = arith.constant 0 : i32
    return %c0_i32, %c0_i32_0 : i32, i32
  }
  func.func @transform_4(%arg0: i32) -> (i32, i32) {
    %c0_i32 = arith.constant 0 : i32
    %c0_i32_0 = arith.constant 0 : i32
    return %arg0, %c0_i32 : i32, i32
  }
  func.func @transform_5(%arg0: i32) -> (i32, i32) {
    %c0_i32 = arith.constant 0 : i32
    %c0_i32_0 = arith.constant 0 : i32
    return %arg0, %c0_i32 : i32, i32
  }
}

</mosaic_0001>

<llo_original>
// kernel: tpu_custom_call.1
$region0: #{tpu_custom_call.1}
  #allocation0 [shape = 'u32[]', space=smem, size = 0x4, offset = 0x4, fixed_abs, tag = 'smem constant byte address 0x4 - core index']
  #allocation1 [shape = 'u32[144,128]{1,0:T(1,128)}', space=vmem, size = 0x12000, scoped, tag = 'internal scratch']
  %s0 = inlined_call_operand.vmem [shape: f32[16,32], index: 0, kind: input, shape index: {}]
  %s1 = inlined_call_operand.vmem [shape: f32[32,16], index: 1, kind: input, shape index: {}]
  %s2 = inlined_call_operand.vmem [shape: f32[1,16], index: 2, kind: input, shape index: {}]
  %s3 = inlined_call_operand.vmem [shape: f32[16,32], index: 3, kind: input, shape index: {}]
  %s4 = inlined_call_operand.hbm [shape: f32[16,32], index: 4, kind: output, shape index: {0}]
  %s5 = inlined_call_operand.hbm [shape: f32[16,16], index: 5, kind: output, shape index: {1}]
  %6 = xla_tuple %s4, %s5
  %s7 = sld [smem:[#allocation0]]
  $region34: #{tpu_custom_call.1} parent=0
    _
  %s9 = ssub.s32 1, %s7
  %s10 = scalar_select 0, %s9, %s7
  $region1: #{tpu_custom_call.1} parent=0
    #allocation2 [shape = 'u8[8192]{0}', space=vmem, size = 0x2000, scoped, tag = 'output window, operand 0, single buffered']
    #allocation3 [shape = 's32[1]{0}', space=sflag, size = 0x4, scoped, tag = 'scoped memory for tpu_custom_call.1']
    #allocation4 [shape = 'u8[8192]{0}', space=vmem, size = 0x2000, scoped, tag = 'output window, operand 1, single buffered']
    #allocation5 [shape = 's32[1]{0}', space=sflag, size = 0x4, scoped, tag = 'scoped memory for tpu_custom_call.1']
    %11 = vsyncpa [#allocation3], 0
    %12 = vsyncpa [#allocation5], 0
    // Predicated region
    $region2: #{tpu_custom_call.1} parent=1 // pred_check
      _
    $region3: #{tpu_custom_call.1} parent=1 // pred_check_branch
      %14 = sbr.rel (0) target = $region5
    $region4: #{tpu_custom_call.1} parent=1 // pred_region
      _
    $region5: #{tpu_custom_call.1} parent=1 // pred_fallthru
      _
    // Predicated region
    $region6: #{tpu_custom_call.1} parent=1 // pred_check
      _
    $region7: #{tpu_custom_call.1} parent=1 // pred_check_branch
      %16 = sbr.rel (0) target = $region9
    $region8: #{tpu_custom_call.1} parent=1 // pred_region
      _
    $region9: #{tpu_custom_call.1} parent=1 // pred_fallthru
      _
    // Predicated region
    $region10: #{tpu_custom_call.1} parent=1 // pred_check
      _
    $region11: #{tpu_custom_call.1} parent=1 // pred_check_branch
      %18 = sbr.rel (0) target = $region13
    $region12: #{tpu_custom_call.1} parent=1 // pred_region
      _
    $region13: #{tpu_custom_call.1} parent=1 // pred_fallthru
      _
    // Predicated region
    $region14: #{tpu_custom_call.1} parent=1 // pred_check
      _
    $region15: #{tpu_custom_call.1} parent=1 // pred_check_branch
      %20 = sbr.rel (0) target = $region17
    $region16: #{tpu_custom_call.1} parent=1 // pred_region
      _
    $region17: #{tpu_custom_call.1} parent=1 // pred_fallthru
      _
    %v21 = vld [vmem:[%s0] sm:$0xff]
    %v22 = vld [vmem:[%s0 + $0x8] sm:$0xff]
    %v23 = vld [vmem:[%s1] sm:$0xff]
    %v24 = vld [vmem:[%s1 + $0x8] sm:$0xff]
    %v25 = vld [vmem:[%s1 + $0x10] sm:$0xff]
    %v26 = vld [vmem:[%s1 + $0x18] sm:$0xff]
    %v27 = vld [vmem:[%s2] sm:$0x1]
    %v29 = vlaneseq
    %v30 = vshrl.u32 %v29, 7
    %v31 = vsub.s32 0, %v30
    %v32 = vrot.slane %v27, %v31
    %vm34 = vcmask 261120
    %v36 = vsel %vm34, %v21, 0
    %v39 = vsel %vm34, %v22, 0
    %41 = vmatprep.subr.mxu0 0.0
    %42 = vmatpush1.msra.mxu0 0.0
    %43 = vmatprep.subr.mxu0 0.0
    %44 = vmatpush1.msra.mxu0 0.0
    %45 = vmatprep.subr.mxu0 0.0
    %46 = vmatpush1.msra.mxu0 0.0
    %47 = vmatprep.subr.mxu0 0.0
    %48 = vmatpush1.msra.mxu0 0.0
    %49 = vmatprep.subr.mxu0 0.0
    %50 = vmatpush1.msra.mxu0 0.0
    %51 = vmatprep.subr.mxu0 0.0
    %52 = vmatpush1.msra.mxu0 0.0
    %53 = vmatprep.subr.mxu0 0.0
    %54 = vmatpush1.msra.mxu0 0.0
    %55 = vmatprep.subr.mxu0 0.0
    %56 = vmatpush1.msra.mxu0 0.0
    %57 = vmatprep.subr.mxu0 0.0
    %58 = vmatpush1.msra.mxu0 0.0
    %59 = vmatprep.subr.mxu0 0.0
    %60 = vmatpush1.msra.mxu0 0.0
    %61 = vmatprep.subr.mxu0 0.0
    %62 = vmatpush1.msra.mxu0 0.0
    %63 = vmatprep.subr.mxu0 0.0
    %64 = vmatpush1.msra.mxu0 0.0
    %65 = vmatprep.subr.mxu0 0.0
    %66 = vmatpush1.msra.mxu0 %v26
    %67 = vmatprep.subr.mxu0 0.0
    %68 = vmatpush1.msra.mxu0 %v25
    %69 = vmatprep.subr.mxu0 0.0
    %70 = vmatpush1.msra.mxu0 %v24
    %71 = vmatprep.subr.mxu0 0.0
    %72 = vmatpush1.msra.mxu0 %v23
    %73 = vmatprep.subr.mxu0 0.0
    %74 = vmatpush2.msra.mxu0 0.0
    %75 = vmatprep.subr.mxu0 0.0
    %76 = vmatpush2.msra.mxu0 0.0
    %77 = vmatprep.subr.mxu0 0.0
    %78 = vmatpush2.msra.mxu0 0.0
    %79 = vmatprep.subr.mxu0 0.0
    %80 = vmatpush2.msra.mxu0 0.0
    %81 = vmatprep.subr.mxu0 0.0
    %82 = vmatpush2.msra.mxu0 0.0
    %83 = vmatprep.subr.mxu0 0.0
    %84 = vmatpush2.msra.mxu0 0.0
    %85 = vmatprep.subr.mxu0 0.0
    %86 = vmatpush2.msra.mxu0 0.0
    %87 = vmatprep.subr.mxu0 0.0
    %88 = vmatpush2.msra.mxu0 0.0
    %89 = vmatprep.subr.mxu0 0.0
    %90 = vmatpush2.msra.mxu0 0.0
    %91 = vmatprep.subr.mxu0 0.0
    %92 = vmatpush2.msra.mxu0 0.0
    %93 = vmatprep.subr.mxu0 0.0
    %94 = vmatpush2.msra.mxu0 0.0
    %95 = vmatprep.subr.mxu0 0.0
    %96 = vmatpush2.msra.mxu0 0.0
    %97 = vmatprep.subr.mxu0 0.0
    %98 = vmatpush2.msra.mxu0 0.0
    %99 = vmatprep.subr.mxu0 0.0
    %100 = vmatpush2.msra.mxu0 0.0
    %101 = vmatprep.subr.mxu0 0.0
    %102 = vmatpush2.msra.mxu0 0.0
    %103 = vmatprep.subr.mxu0 0.0
    %104 = vmatpush2.msra.mxu0 0.0
    %105 = vmatprep.mubr.f32.mxu0 0.0
    %106 = vmatmul.mubr.f32.gmra.mxu0 %v36
    %v107 = vpop.f32.mrf.mxu0
    %v108 = vadd.f32 %v32, %v107
    %v109 = vpop.f32.mrf.mxu0
    %110 = vmatprep.mubr.f32.mxu0 0.0
    %111 = vmatmul.mubr.f32.gmra.mxu0 %v39
    %v112 = vpop.f32.mrf.mxu0
    %v113 = vadd.f32 %v32, %v112
    %v114 = vpop.f32.mrf.mxu0
    %115 = vdwg.mxu0
    %vm116 = vcmask 130048
    %v117 = vsel %vm116, %v108, -inf
    %118 = vmax.xlane.f32.xlu0 %v117
    %v119 = vpop.xlane.xlu0 %118
    %v120 = vsel %vm116, %v113, -inf
    %121 = vmax.xlane.f32.xlu0 %v120
    %v122 = vpop.xlane.xlu0 %121
    %v123 = vsub.f32 %v108, %v119
    %v124 = vsub.f32 %v113, %v122
    %v125 = vmul.f32 %v123, 1.442695
    %v126 = vpow.pop %v125
    %v127 = vmul.f32 %v124, 1.442695
    %v128 = vpow.pop %v127
    %v129 = vsel %vm116, %v126, 0.0
    %130 = vadd.xlane.f32.xlu0 %v129
    %v131 = vpop.xlane.xlu0 %130
    %v132 = vsel %vm116, %v128, 0.0
    %133 = vadd.xlane.f32.xlu0 %v132
    %v134 = vpop.xlane.xlu0 %133
    %v135 = vrcp.pop %v131
    %v136 = vrcp.pop %v134
    %v137 = vmul.f32 %v126, %v135
    %v138 = vmul.f32 %v128, %v136
    %v139 = vld [vmem:[%s3] sm:$0xff]
    %v140 = vld [vmem:[%s3 + $0x8] sm:$0xff]
    %v142 = vsel %vm116, %v137, 0
    %v145 = vsel %vm116, %v138, 0
    %147 = vmatprep.subr.mxu0 0.0
    %148 = vmatpush1.msra.mxu0 0.0
    %149 = vmatprep.subr.mxu0 0.0
    %150 = vmatpush1.msra.mxu0 0.0
    %151 = vmatprep.subr.mxu0 0.0
    %152 = vmatpush1.msra.mxu0 0.0
    %153 = vmatprep.subr.mxu0 0.0
    %154 = vmatpush1.msra.mxu0 0.0
    %155 = vmatprep.subr.mxu0 0.0
    %156 = vmatpush1.msra.mxu0 0.0
    %157 = vmatprep.subr.mxu0 0.0
    %158 = vmatpush1.msra.mxu0 0.0
    %159 = vmatprep.subr.mxu0 0.0
    %160 = vmatpush1.msra.mxu0 0.0
    %161 = vmatprep.subr.mxu0 0.0
    %162 = vmatpush1.msra.mxu0 0.0
    %163 = vmatprep.subr.mxu0 0.0
    %164 = vmatpush1.msra.mxu0 0.0
    %165 = vmatprep.subr.mxu0 0.0
    %166 = vmatpush1.msra.mxu0 0.0
    %167 = vmatprep.subr.mxu0 0.0
    %168 = vmatpush1.msra.mxu0 0.0
    %169 = vmatprep.subr.mxu0 0.0
    %170 = vmatpush1.msra.mxu0 0.0
    %171 = vmatprep.subr.mxu0 0.0
    %172 = vmatpush1.msra.mxu0 0.0
    %173 = vmatprep.subr.mxu0 0.0
    %174 = vmatpush1.msra.mxu0 0.0
    %175 = vmatprep.subr.mxu0 0.0
    %176 = vmatpush1.msra.mxu0 %v140
    %177 = vmatprep.subr.mxu0 0.0
    %178 = vmatpush1.msra.mxu0 %v139
    %179 = vmatprep.subr.mxu0 0.0
    %180 = vmatpush2.msra.mxu0 0.0
    %181 = vmatprep.subr.mxu0 0.0
    %182 = vmatpush2.msra.mxu0 0.0
    %183 = vmatprep.subr.mxu0 0.0
    %184 = vmatpush2.msra.mxu0 0.0
    %185 = vmatprep.subr.mxu0 0.0
    %186 = vmatpush2.msra.mxu0 0.0
    %187 = vmatprep.subr.mxu0 0.0
    %188 = vmatpush2.msra.mxu0 0.0
    %189 = vmatprep.subr.mxu0 0.0
    %190 = vmatpush2.msra.mxu0 0.0
    %191 = vmatprep.subr.mxu0 0.0
    %192 = vmatpush2.msra.mxu0 0.0
    %193 = vmatprep.subr.mxu0 0.0
    %194 = vmatpush2.msra.mxu0 0.0
    %195 = vmatprep.subr.mxu0 0.0
    %196 = vmatpush2.msra.mxu0 0.0
    %197 = vmatprep.subr.mxu0 0.0
    %198 = vmatpush2.msra.mxu0 0.0
    %199 = vmatprep.subr.mxu0 0.0
    %200 = vmatpush2.msra.mxu0 0.0
    %201 = vmatprep.subr.mxu0 0.0
    %202 = vmatpush2.msra.mxu0 0.0
    %203 = vmatprep.subr.mxu0 0.0
    %204 = vmatpush2.msra.mxu0 0.0
    %205 = vmatprep.subr.mxu0 0.0
    %206 = vmatpush2.msra.mxu0 0.0
    %207 = vmatprep.subr.mxu0 0.0
    %208 = vmatpush2.msra.mxu0 0.0
    %209 = vmatprep.subr.mxu0 0.0
    %210 = vmatpush2.msra.mxu0 0.0
    %211 = vmatprep.mubr.f32.mxu0 0.0
    %212 = vmatmul.mubr.f32.gmra.mxu0 %v142
    %v213 = vpop.f32.mrf.mxu0
    %v214 = vadd.f32 0.0, %v213
    %v215 = vpop.f32.mrf.mxu0
    %216 = vmatprep.mubr.f32.mxu0 0.0
    %217 = vmatmul.mubr.f32.gmra.mxu0 %v145
    %v218 = vpop.f32.mrf.mxu0
    %v219 = vadd.f32 0.0, %v218
    %v220 = vpop.f32.mrf.mxu0
    %221 = vdwg.mxu0
    %222 = vst.msk [vmem:[#allocation2] sm:$0xff] %vm34, %v214
    %223 = vst.msk [vmem:[#allocation2 + $0x8] sm:$0xff] %vm34, %v219
    %224 = vst.msk [vmem:[#allocation4] sm:$0xff] %vm116, %v137
    %225 = vst.msk [vmem:[#allocation4 + $0x8] sm:$0xff] %vm116, %v138
    // Predicated region
    $region18: #{tpu_custom_call.1} parent=1 // pred_check
      _
    $region19: #{tpu_custom_call.1} parent=1 // pred_check_branch
      %227 = sbr.rel (0) target = $region21
    $region20: #{tpu_custom_call.1} parent=1 // pred_region
      %s229 = ssub.s32 256, 256
      %230 = vsyncadd [#allocation3], %s229
      %s231 = sshll.u32 [#allocation2], 4
      %s232 = int_to_ptr.vmem [resolvable:$true] %s231
      %237 = dma.vmem_to_hbm [thread:$0]  %s232, 256, %s4, [#allocation3], 128, 128, 8
    $region21: #{tpu_custom_call.1} parent=1 // pred_fallthru
      _
    // Predicated region
    $region22: #{tpu_custom_call.1} parent=1 // pred_check
      _
    $region23: #{tpu_custom_call.1} parent=1 // pred_check_branch
      %239 = sbr.rel (0) target = $region25
    $region24: #{tpu_custom_call.1} parent=1 // pred_region
      %s241 = ssub.s32 256, 256
      %242 = vsyncadd [#allocation5], %s241
      %s243 = sshll.u32 [#allocation4], 4
      %s244 = int_to_ptr.vmem [resolvable:$true] %s243
      %249 = dma.vmem_to_hbm [thread:$0]  %s244, 256, %s5, [#allocation5], 128, 128, 8
    $region25: #{tpu_custom_call.1} parent=1 // pred_fallthru
      _
    // Predicated region
    $region26: #{tpu_custom_call.1} parent=1 // pred_check
      _
    $region27: #{tpu_custom_call.1} parent=1 // pred_check_branch
      %251 = sbr.rel (0) target = $region29
    $region28: #{tpu_custom_call.1} parent=1 // pred_region
      %252 = dma.done [#allocation3], 256
    $region29: #{tpu_custom_call.1} parent=1 // pred_fallthru
      _
    // Predicated region
    $region30: #{tpu_custom_call.1} parent=1 // pred_check
      _
    $region31: #{tpu_custom_call.1} parent=1 // pred_check_branch
      %254 = sbr.rel (0) target = $region33
    $region32: #{tpu_custom_call.1} parent=1 // pred_region
      %255 = dma.done [#allocation5], 256
    $region33: #{tpu_custom_call.1} parent=1 // pred_fallthru
      _
    %256 = vsyncpa [#allocation3], 1
    %257 = vsyncpa [#allocation5], 1

</llo_original>
